<compile_context>
chip_gen: v7x
topology: tpu7x:2x2x1
jax: 0.10.0
libtpu: 0.0.40
codegen_flags: <defaults>
</compile_context>

<pallas_src>
import functools

import jax
import jax.numpy as jnp
from jax.experimental import pallas as pl
from jax.experimental.pallas import tpu as pltpu


def _layernorm_kernel(x_ref, g_ref, b_ref, o_ref, *, eps, d_model):
    # x_ref: (TM, d_model) rows; g_ref/b_ref: (1, d_model) gain/bias (f32).
    x = x_ref[...].astype(jnp.float32)
    mean = jnp.mean(x, axis=-1, keepdims=True)
    xc = x - mean
    # torch.Tensor.std defaults to the unbiased estimator (divide by d-1),
    # and the module divides by (std + eps), not sqrt(var + eps).
    denom = max(d_model - 1, 1)
    var = jnp.sum(xc * xc, axis=-1, keepdims=True) * (1.0 / denom)
    std = jnp.sqrt(var)
    inv = 1.0 / (std + eps)          # one reciprocal per row, not per element
    y = (xc * inv) * g_ref[...] + b_ref[...]
    o_ref[...] = y.astype(o_ref.dtype)


def _round_up(n, m):
    return ((n + m - 1) // m) * m


def layernorm_pallas(x, gamma, beta, *, eps=1e-6, block_rows=2048):
    """LayerNorm over the last dim of x, matching the PyTorch LayerNorm module."""
    orig_shape = x.shape
    d_model = orig_shape[-1]
    x2 = x.reshape(-1, d_model)
    n_rows = x2.shape[0]

    # Row block: as large as reasonable (amortize per-step overhead) while the
    # double-buffered in+out footprint stays well under the v5e 16 MiB scoped
    # VMEM default.  Multiple of 16 -> valid sublane tiling for f32 and bf16.
    tm = min(block_rows, _round_up(n_rows, 16))
    grid = pl.cdiv(n_rows, tm)       # partial last block handled by Pallas

    g2 = gamma.reshape(1, d_model).astype(jnp.float32)
    b2 = beta.reshape(1, d_model).astype(jnp.float32)

    out = pl.pallas_call(
        functools.partial(_layernorm_kernel, eps=eps, d_model=d_model),
        out_shape=jax.ShapeDtypeStruct((n_rows, d_model), x.dtype),
        grid_spec=pltpu.PrefetchScalarGridSpec(
            num_scalar_prefetch=0,
            grid=(grid,),
            in_specs=[
                pl.BlockSpec((tm, d_model), lambda i: (i, 0)),
                pl.BlockSpec((1, d_model), lambda i: (0, 0)),
                pl.BlockSpec((1, d_model), lambda i: (0, 0)),
            ],
            out_specs=pl.BlockSpec((tm, d_model), lambda i: (i, 0)),
        ),
        compiler_params=pltpu.CompilerParams(
            dimension_semantics=("parallel",),
            # Let XLA fuse the (elementwise) producer of x into the kernel's
            # input read; gamma/beta are tiny constants -> no fusion needed.
            allow_input_fusion=[True, False, False],
        ),
    )(x2, g2, b2)

    return out.reshape(orig_shape)


def decoder_forward(x, memory, src_mask, tgt_mask, layers, gamma, beta, *, eps=1e-6):
    """Decoder.forward: apply each decoder layer, then the final LayerNorm."""
    # TODO(synk): DecoderLayer is not defined in the spec (it is a ctor arg);
    # the N sub-layers are applied here as opaque JAX callables, and only the
    # Decoder's own LayerNorm runs as a Pallas kernel.
    for layer in layers:
        x = layer(x, memory, src_mask, tgt_mask)
    return layernorm_pallas(x, gamma, beta, eps=eps)


if __name__ == "__main__":
    # Small deterministic problem: batch=2, seq=8, d_model=128 (lane-dense).
    B, S, D = 2, 8, 128
    N_LAYERS = 2
    eps = 1e-6

    key = jax.random.PRNGKey(0)
    k_x, k_m = jax.random.split(key)
    x = jax.random.normal(k_x, (B, S, D), dtype=jnp.float32)
    memory = jax.random.normal(k_m, (B, S, D), dtype=jnp.float32)
    src_mask = jnp.ones((B, 1, S), dtype=jnp.bool_)
    tgt_mask = jnp.broadcast_to(jnp.tril(jnp.ones((S, S), dtype=jnp.bool_)), (B, S, S))

    # LayerNorm parameters (PyTorch init: a_2 = ones, b_2 = zeros).
    gamma = jnp.ones((D,), dtype=jnp.float32)
    beta = jnp.zeros((D,), dtype=jnp.float32)

    # Placeholder stand-ins for the unspecified DecoderLayer (same call
    # signature); clearly not the real attention/FFN layer.
    def make_layer(alpha):
        def layer(x_in, mem, sm, tm_):
            return x_in + alpha * mem
        return layer

    layers = [make_layer(0.1 * (i + 1)) for i in range(N_LAYERS)]

    out = decoder_forward(x, memory, src_mask, tgt_mask, layers, gamma, beta, eps=eps)
    out = jax.block_until_ready(out)

    # Pure-JAX reference matching the PyTorch module exactly
    # (unbiased std, division by (std + eps)).
    ref = x
    for layer in layers:
        ref = layer(ref, memory, src_mask, tgt_mask)
    mean = ref.mean(-1, keepdims=True)
    std = jnp.sqrt(((ref - mean) ** 2).sum(-1, keepdims=True) / (D - 1))
    ref = gamma * (ref - mean) / (std + eps) + beta

    assert out.shape == (B, S, D)
    assert out.dtype == jnp.float32
    assert jnp.allclose(out, ref, atol=1e-5, rtol=1e-5)
    print("KERNEL_OK")
</pallas_src>

<mosaic_0001>
module attributes {stable_mosaic.version = 11 : i64} {
  func.func @_layernorm_kernel(%arg0: i32, %arg1: memref<16x128xf32, #tpu.memory_space<vmem>>, %arg2: memref<1x128xf32, #tpu.memory_space<vmem>>, %arg3: memref<1x128xf32, #tpu.memory_space<vmem>>, %arg4: memref<16x128xf32, #tpu.memory_space<vmem>>) attributes {dimension_semantics = [#tpu.dimension_semantics<parallel>], iteration_bounds = array<i64: 1>, scalar_prefetch = 0 : i64, scratch_operands = 0 : i64, tpu.core_type = #tpu.core_type<tc>, window_params = [{transform_indices = @transform_0, window_bounds = array<i64: 16, 128>}, {pipeline_mode = #tpu.pipeline_mode<synchronous>, transform_indices = @transform_1, window_bounds = array<i64: 1, 128>}, {pipeline_mode = #tpu.pipeline_mode<synchronous>, transform_indices = @transform_2, window_bounds = array<i64: 1, 128>}, {transform_indices = @transform_3, window_bounds = array<i64: 16, 128>}]} {
    %c0 = arith.constant 0 : index
    %c0_0 = arith.constant 0 : index
    %0 = vector.load %arg1[%c0, %c0_0] : memref<16x128xf32, #tpu.memory_space<vmem>>, vector<16x128xf32>
    %cst = arith.constant dense<0.000000e+00> : vector<16xf32>
    %1 = vector.multi_reduction <add>, %0, %cst [1] : vector<16x128xf32> to vector<16xf32>
    %2 = vector.shape_cast %1 : vector<16xf32> to vector<16x1xf32>
    %cst_1 = arith.constant 1.280000e+02 : f32
    %3 = vector.broadcast %cst_1 : f32 to vector<16x1xf32>
    %4 = arith.divf %2, %3 : vector<16x1xf32>
    %5 = vector.broadcast %4 : vector<16x1xf32> to vector<16x128xf32>
    %6 = arith.subf %0, %5 : vector<16x128xf32>
    %7 = arith.mulf %6, %6 : vector<16x128xf32>
    %cst_2 = arith.constant dense<0.000000e+00> : vector<16xf32>
    %8 = vector.multi_reduction <add>, %7, %cst_2 [1] : vector<16x128xf32> to vector<16xf32>
    %9 = vector.shape_cast %8 : vector<16xf32> to vector<16x1xf32>
    %cst_3 = arith.constant 0.00787401571 : f32
    %10 = vector.broadcast %cst_3 : f32 to vector<16x1xf32>
    %11 = arith.mulf %9, %10 : vector<16x1xf32>
    %12 = math.sqrt %11 : vector<16x1xf32>
    %cst_4 = arith.constant 9.99999997E-7 : f32
    %13 = vector.broadcast %cst_4 : f32 to vector<16x1xf32>
    %14 = arith.addf %12, %13 : vector<16x1xf32>
    %cst_5 = arith.constant 1.000000e+00 : f32
    %15 = vector.broadcast %cst_5 : f32 to vector<16x1xf32>
    %16 = arith.divf %15, %14 : vector<16x1xf32>
    %17 = vector.broadcast %16 : vector<16x1xf32> to vector<16x128xf32>
    %18 = arith.mulf %6, %17 : vector<16x128xf32>
    %c0_6 = arith.constant 0 : index
    %c0_7 = arith.constant 0 : index
    %19 = vector.load %arg2[%c0_6, %c0_7] : memref<1x128xf32, #tpu.memory_space<vmem>>, vector<1x128xf32>
    %20 = vector.broadcast %19 : vector<1x128xf32> to vector<16x128xf32>
    %21 = arith.mulf %18, %20 : vector<16x128xf32>
    %c0_8 = arith.constant 0 : index
    %c0_9 = arith.constant 0 : index
    %22 = vector.load %arg3[%c0_8, %c0_9] : memref<1x128xf32, #tpu.memory_space<vmem>>, vector<1x128xf32>
    %23 = vector.broadcast %22 : vector<1x128xf32> to vector<16x128xf32>
    %24 = arith.addf %21, %23 : vector<16x128xf32>
    %c0_10 = arith.constant 0 : index
    %c0_11 = arith.constant 0 : index
    %25 = vector.load %arg4[%c0_10, %c0_11] : memref<16x128xf32, #tpu.memory_space<vmem>>, vector<16x128xf32>
    tpu.vector_store %arg4[%c0_10, %c0_11], %24 {strides = array<i32>} : memref<16x128xf32, #tpu.memory_space<vmem>>, vector<16x128xf32>,
    return
  }
  func.func @transform_0(%arg0: i32) -> (i32, i32) {
    %c0_i32 = arith.constant 0 : i32
    %c0_i32_0 = arith.constant 0 : i32
    return %arg0, %c0_i32 : i32, i32
  }
  func.func @transform_1(%arg0: i32) -> (i32, i32) {
    %c0_i32 = arith.constant 0 : i32
    %c0_i32_0 = arith.constant 0 : i32
    %c0_i32_1 = arith.constant 0 : i32
    return %c0_i32, %c0_i32_0 : i32, i32
  }
  func.func @transform_2(%arg0: i32) -> (i32, i32) {
    %c0_i32 = arith.constant 0 : i32
    %c0_i32_0 = arith.constant 0 : i32
    %c0_i32_1 = arith.constant 0 : i32
    return %c0_i32, %c0_i32_0 : i32, i32
  }
  func.func @transform_3(%arg0: i32) -> (i32, i32) {
    %c0_i32 = arith.constant 0 : i32
    %c0_i32_0 = arith.constant 0 : i32
    return %arg0, %c0_i32 : i32, i32
  }
}

</mosaic_0001>

<llo_original>
// kernel: tpu_custom_call.1
$region0: #{tpu_custom_call.1}
  #allocation0 [shape = 'u32[]', space=smem, size = 0x4, offset = 0x4, fixed_abs, tag = 'smem constant byte address 0x4 - core index']
  #allocation1 [shape = 'u32[144,128]{1,0:T(1,128)}', space=vmem, size = 0x12000, scoped, tag = 'internal scratch']
  %s0 = inlined_call_operand.hbm [shape: f32[16,128], index: 0, kind: input, shape index: {}]
  %s1 = inlined_call_operand.vmem [shape: f32[1,128], index: 1, kind: input, shape index: {}]
  %s2 = inlined_call_operand.vmem [shape: f32[1,128], index: 2, kind: input, shape index: {}]
  %s3 = inlined_call_operand.hbm [shape: f32[16,128], index: 3, kind: output, shape index: {}]
  %s4 = sld [smem:[#allocation0]]
  $region26: #{tpu_custom_call.1} parent=0
    _
  %s6 = ssub.s32 1, %s4
  %s7 = scalar_select 0, %s6, %s4
  $region1: #{tpu_custom_call.1} parent=0
    #allocation2 [shape = 'u8[8192]{0}', space=vmem, size = 0x2000, scoped, tag = 'input window, operand 0, single buffered']
    #allocation3 [shape = 's32[1]{0}', space=sflag, size = 0x4, scoped, tag = 'scoped memory for tpu_custom_call.1']
    #allocation4 [shape = 's32[1]{0}', space=sflag, size = 0x4, scoped, tag = 'scoped memory for tpu_custom_call.1']
    #allocation5 [shape = 'u8[8192]{0}', space=vmem, size = 0x2000, scoped, tag = 'output window, operand 0, single buffered']
    %8 = vsyncpa [#allocation3], 0
    %9 = vsyncpa [#allocation4], 0
    // Predicated region
    $region2: #{tpu_custom_call.1} parent=1 // pred_check
      _
    $region3: #{tpu_custom_call.1} parent=1 // pred_check_branch
      %11 = sbr.rel (0) target = $region5
    $region4: #{tpu_custom_call.1} parent=1 // pred_region
      %s13 = ssub.s32 256, 256
      %14 = vsyncadd [#allocation3], %s13
      %s15 = sshll.u32 [#allocation2], 4
      %s16 = int_to_ptr.vmem [resolvable:$true] %s15
      %21 = dma.hbm_to_vmem [thread:$0]  %s0, 256, %s16, [#allocation3], 128, 128, 8
    $region5: #{tpu_custom_call.1} parent=1 // pred_fallthru
      _
    // Predicated region
    $region6: #{tpu_custom_call.1} parent=1 // pred_check
      _
    $region7: #{tpu_custom_call.1} parent=1 // pred_check_branch
      %23 = sbr.rel (0) target = $region9
    $region8: #{tpu_custom_call.1} parent=1 // pred_region
      _
    $region9: #{tpu_custom_call.1} parent=1 // pred_fallthru
      _
    // Predicated region
    $region10: #{tpu_custom_call.1} parent=1 // pred_check
      _
    $region11: #{tpu_custom_call.1} parent=1 // pred_check_branch
      %25 = sbr.rel (0) target = $region13
    $region12: #{tpu_custom_call.1} parent=1 // pred_region
      _
    $region13: #{tpu_custom_call.1} parent=1 // pred_fallthru
      _
    // Predicated region
    $region14: #{tpu_custom_call.1} parent=1 // pred_check
      _
    $region15: #{tpu_custom_call.1} parent=1 // pred_check_branch
      %27 = sbr.rel (0) target = $region17
    $region16: #{tpu_custom_call.1} parent=1 // pred_region
      %28 = dma.done [#allocation3], 256
    $region17: #{tpu_custom_call.1} parent=1 // pred_fallthru
      _
    %v29 = vld [vmem:[#allocation2] sm:$0xff]
    %v30 = vld [vmem:[#allocation2 + $0x8] sm:$0xff]
    %31 = vadd.xlane.f32.xlu0 %v29
    %v32 = vpop.xlane.xlu0 %31
    %33 = vadd.xlane.f32.xlu0 %v30
    %v34 = vpop.xlane.xlu0 %33
    %v35 = vrcp.pop 128.0
    %v36 = vmul.f32 %v32, %v35
    %v37 = vmul.f32 %v34, %v35
    %v38 = vsub.f32 %v29, %v36
    %v39 = vsub.f32 %v30, %v37
    %v40 = vmul.f32 %v38, %v38
    %v41 = vmul.f32 %v39, %v39
    %42 = vadd.xlane.f32.xlu0 %v40
    %v43 = vpop.xlane.xlu0 %42
    %44 = vadd.xlane.f32.xlu0 %v41
    %v45 = vpop.xlane.xlu0 %44
    %v46 = vmul.f32 %v43, 0.007874016
    %v47 = vmul.f32 %v45, 0.007874016
    %v48 = vrsqrt.pop %v46
    %v49 = vmul.f32 %v46, %v48
    %vm50 = vcmp.eq.f32.partialorder %v46, inf
    %v51 = vsel %vm50, %v46, %v49
    %vm52 = vcmp.eq.f32.partialorder %v46, 0.0
    %v53 = vand.u32 %v46, 2147483648
    %v54 = vsel %vm52, %v53, %v51
    %v55 = vrsqrt.pop %v47
    %v56 = vmul.f32 %v47, %v55
    %vm57 = vcmp.eq.f32.partialorder %v47, inf
    %v58 = vsel %vm57, %v47, %v56
    %vm59 = vcmp.eq.f32.partialorder %v47, 0.0
    %v60 = vand.u32 %v47, 2147483648
    %v61 = vsel %vm59, %v60, %v58
    %v62 = vadd.f32 %v54, 1e-06
    %v63 = vadd.f32 %v61, 1e-06
    %v64 = vrcp.pop %v62
    %v65 = vmul.f32 1.0, %v64
    %v66 = vrcp.pop %v63
    %v67 = vmul.f32 1.0, %v66
    %v68 = vmul.f32 %v38, %v65
    %v69 = vmul.f32 %v39, %v67
    %v70 = vld [vmem:[%s1] sm:$0x1]
    %v72 = vlaneseq
    %v73 = vshrl.u32 %v72, 7
    %v74 = vsub.s32 0, %v73
    %v75 = vrot.slane %v70, %v74
    %v77 = vmul.f32 %v68, %v75
    %v78 = vmul.f32 %v69, %v75
    %v79 = vld [vmem:[%s2] sm:$0x1]
    %v81 = vlaneseq
    %v82 = vshrl.u32 %v81, 7
    %v83 = vsub.s32 0, %v82
    %v84 = vrot.slane %v79, %v83
    %v86 = vadd.f32 %v77, %v84
    %v87 = vadd.f32 %v78, %v84
    %88 = vst [vmem:[#allocation5] sm:$0xff] %v86
    %89 = vst [vmem:[#allocation5 + $0x8] sm:$0xff] %v87
    // Predicated region
    $region18: #{tpu_custom_call.1} parent=1 // pred_check
      _
    $region19: #{tpu_custom_call.1} parent=1 // pred_check_branch
      %91 = sbr.rel (0) target = $region21
    $region20: #{tpu_custom_call.1} parent=1 // pred_region
      %s93 = ssub.s32 256, 256
      %94 = vsyncadd [#allocation4], %s93
      %s95 = sshll.u32 [#allocation5], 4
      %s96 = int_to_ptr.vmem [resolvable:$true] %s95
      %101 = dma.vmem_to_hbm [thread:$0]  %s96, 256, %s3, [#allocation4], 128, 128, 8
    $region21: #{tpu_custom_call.1} parent=1 // pred_fallthru
      _
    // Predicated region
    $region22: #{tpu_custom_call.1} parent=1 // pred_check
      _
    $region23: #{tpu_custom_call.1} parent=1 // pred_check_branch
      %103 = sbr.rel (0) target = $region25
    $region24: #{tpu_custom_call.1} parent=1 // pred_region
      %104 = dma.done [#allocation4], 256
    $region25: #{tpu_custom_call.1} parent=1 // pred_fallthru
      _
    %105 = vsyncpa [#allocation3], 1
    %106 = vsyncpa [#allocation4], 1

</llo_original>
